<compile_context>
chip_gen: v7x
topology: tpu7x:2x2x1
jax: 0.10.0
libtpu: 0.0.40
codegen_flags: <defaults>
</compile_context>

<pallas_src>
import math

import jax
import jax.numpy as jnp
from jax.experimental import pallas as pl
from jax.experimental.pallas import tpu as pltpu


def _time_embed_kernel(t_ref, freqs_ref, w1s_ref, w1c_ref, b1_ref, w2_ref, b2_ref,
                       out_ref):
    # frac[b, i] = t[b] * freq[i]  — reproduces row t of the sinusoidal table.
    frac = t_ref[...].astype(jnp.float32) * freqs_ref[...]           # (B, d_model//2)
    s = jnp.sin(frac).astype(jnp.bfloat16)                           # EUP, then bf16 for MXU
    c = jnp.cos(frac).astype(jnp.bfloat16)

    # Linear(d_model, out_dim):  emb @ w1  ==  sin @ w1[0::2]  +  cos @ w1[1::2]
    h = (jnp.dot(s, w1s_ref[...], preferred_element_type=jnp.float32)
         + jnp.dot(c, w1c_ref[...], preferred_element_type=jnp.float32)
         + b1_ref[...])                                               # (B, out_dim) f32
    h = h * jax.nn.sigmoid(h)                                         # SiLU in f32

    # Linear(out_dim, out_dim)
    out = jnp.dot(h.astype(jnp.bfloat16), w2_ref[...],
                  preferred_element_type=jnp.float32) + b2_ref[...]   # (B, out_dim) f32
    out_ref[...] = out.astype(out_ref.dtype)


def sinusoidal_time_embedding(t, d_model, w1, b1, w2, b2):
    """t: (B,) integer timesteps.  w1: (d_model, out_dim), w2: (out_dim, out_dim)
    (Linear weights stored pre-transposed as (in, out)).  Returns (B, out_dim) f32."""
    assert d_model % 2 == 0 and w1.shape[0] == d_model
    B = t.shape[0]
    out_dim = w2.shape[1]

    # Frequencies of the sinusoidal table (same as the PyTorch `denominator`).
    freqs = jnp.exp(jnp.arange(0, d_model, 2, dtype=jnp.float32)
                    * (-math.log(10000.0) / d_model)).reshape(1, d_model // 2)

    # Fold the interleaved sin/cos column order of the table into w1's rows and
    # store the MXU operands as bf16 (accumulation stays f32 inside the kernel).
    w1_sin = w1[0::2, :].astype(jnp.bfloat16)    # rows multiplied by sin(...) features
    w1_cos = w1[1::2, :].astype(jnp.bfloat16)    # rows multiplied by cos(...) features
    w2_bf = w2.astype(jnp.bfloat16)

    t2d = t.astype(jnp.int32).reshape(B, 1)

    vmem = pl.BlockSpec(memory_space=pltpu.MemorySpace.VMEM)
    return pl.pallas_call(
        _time_embed_kernel,
        out_shape=jax.ShapeDtypeStruct((B, out_dim), jnp.float32),
        in_specs=[vmem] * 7,
        out_specs=vmem,
    )(t2d, freqs, w1_sin, w1_cos,
      b1.reshape(1, -1).astype(jnp.float32),
      w2_bf,
      b2.reshape(1, -1).astype(jnp.float32))


# ---------------- pure-JAX reference (mirrors the PyTorch module exactly) ----------------

def make_sinusoidal_table(max_pos: int, d_model: int) -> jnp.ndarray:
    assert d_model % 2 == 0
    numerator = jnp.arange(0, max_pos, dtype=jnp.float32)                    # (max_pos,)
    denominator = jnp.exp(jnp.arange(0, d_model, 2, dtype=jnp.float32)
                          * (-math.log(10000.0) / d_model))                  # (d_model/2,)
    frac = numerator[:, None] * denominator[None, :]                         # (max_pos, d_model/2)
    # torch.stack((sin, cos), dim=-1).view(max_pos, d_model) -> interleaved sin/cos
    return jnp.stack((jnp.sin(frac), jnp.cos(frac)), axis=-1).reshape(max_pos, d_model)


def _reference(t, embd, w1, b1, w2, b2):
    x = embd[t]                       # nn.Embedding.from_pretrained lookup
    h = x @ w1 + b1                   # Linear(d_model, out_dim)
    h = h * jax.nn.sigmoid(h)         # SiLU
    return h @ w2 + b2                # Linear(out_dim, out_dim)


if __name__ == "__main__":
    # Small shapes consistent with the module's forward.
    max_pos, d_model, out_dim = 128, 32, 64
    B = 8

    key = jax.random.PRNGKey(0)
    k1, k2, k3, k4, k5 = jax.random.split(key, 5)

    # Deterministic parameter init (Linear weights stored pre-transposed: (in, out)).
    bound1 = 1.0 / math.sqrt(d_model)
    bound2 = 1.0 / math.sqrt(out_dim)
    w1 = jax.random.uniform(k1, (d_model, out_dim), jnp.float32, -bound1, bound1)
    b1 = jax.random.uniform(k2, (out_dim,), jnp.float32, -bound1, bound1)
    w2 = jax.random.uniform(k3, (out_dim, out_dim), jnp.float32, -bound2, bound2)
    b2 = jax.random.uniform(k4, (out_dim,), jnp.float32, -bound2, bound2)

    # Integer timesteps in [0, max_pos)
    t = jax.random.randint(k5, (B,), 0, max_pos, dtype=jnp.int32)

    out = sinusoidal_time_embedding(t, d_model, w1, b1, w2, b2)
    out = jax.block_until_ready(out)

    # Exact f32 table-lookup reference (the original PyTorch semantics).
    embd = make_sinusoidal_table(max_pos, d_model)
    ref = _reference(t, embd, w1, b1, w2, b2)

    assert out.shape == (B, out_dim)
    # Tolerance accounts for bf16 MXU operands (f32 accumulation); typical error ~1e-3.
    assert jnp.allclose(out, ref, atol=5e-2, rtol=5e-2), "mismatch vs pure-JAX reference"

    print("KERNEL_OK")
</pallas_src>

<mosaic_0001>
module attributes {stable_mosaic.version = 11 : i64} {
  func.func @_time_embed_kernel(%arg0: memref<8x1xi32, #tpu.memory_space<vmem>>, %arg1: memref<1x16xf32, #tpu.memory_space<vmem>>, %arg2: memref<16x64xbf16, #tpu.memory_space<vmem>>, %arg3: memref<16x64xbf16, #tpu.memory_space<vmem>>, %arg4: memref<1x64xf32, #tpu.memory_space<vmem>>, %arg5: memref<64x64xbf16, #tpu.memory_space<vmem>>, %arg6: memref<1x64xf32, #tpu.memory_space<vmem>>, %arg7: memref<8x64xf32, #tpu.memory_space<vmem>>) attributes {dimension_semantics = [], scalar_prefetch = 0 : i64, scratch_operands = 0 : i64, tpu.core_type = #tpu.core_type<tc>} {
    %c0 = arith.constant 0 : index
    %c0_0 = arith.constant 0 : index
    %0 = vector.load %arg0[%c0, %c0_0] : memref<8x1xi32, #tpu.memory_space<vmem>>, vector<8x1xi32>
    %1 = arith.sitofp %0 : vector<8x1xi32> to vector<8x1xf32>
    %c0_1 = arith.constant 0 : index
    %c0_2 = arith.constant 0 : index
    %2 = vector.load %arg1[%c0_1, %c0_2] : memref<1x16xf32, #tpu.memory_space<vmem>>, vector<1x16xf32>
    %3 = vector.broadcast %1 : vector<8x1xf32> to vector<8x16xf32>
    %4 = vector.broadcast %2 : vector<1x16xf32> to vector<8x16xf32>
    %5 = arith.mulf %3, %4 : vector<8x16xf32>
    %6 = math.sin %5 : vector<8x16xf32>
    %7 = arith.truncf %6 : vector<8x16xf32> to vector<8x16xbf16>
    %8 = math.cos %5 : vector<8x16xf32>
    %9 = arith.truncf %8 : vector<8x16xf32> to vector<8x16xbf16>
    %c0_3 = arith.constant 0 : index
    %c0_4 = arith.constant 0 : index
    %10 = vector.load %arg2[%c0_3, %c0_4] : memref<16x64xbf16, #tpu.memory_space<vmem>>, vector<16x64xbf16>
    %cst = arith.constant dense<0.000000e+00> : vector<8x64xf32>
    %11 = tpu.matmul %7, %10, %cst {dimension_numbers = #tpu.dot_dimension_numbers<[1], [0], [0], [1], [0, 0, 1, 1], [], []>} : vector<8x16xbf16>, vector<16x64xbf16>, vector<8x64xf32> -> vector<8x64xf32>
    %c0_5 = arith.constant 0 : index
    %c0_6 = arith.constant 0 : index
    %12 = vector.load %arg3[%c0_5, %c0_6] : memref<16x64xbf16, #tpu.memory_space<vmem>>, vector<16x64xbf16>
    %cst_7 = arith.constant dense<0.000000e+00> : vector<8x64xf32>
    %13 = tpu.matmul %9, %12, %cst_7 {dimension_numbers = #tpu.dot_dimension_numbers<[1], [0], [0], [1], [0, 0, 1, 1], [], []>} : vector<8x16xbf16>, vector<16x64xbf16>, vector<8x64xf32> -> vector<8x64xf32>
    %14 = arith.addf %11, %13 : vector<8x64xf32>
    %c0_8 = arith.constant 0 : index
    %c0_9 = arith.constant 0 : index
    %15 = vector.load %arg4[%c0_8, %c0_9] : memref<1x64xf32, #tpu.memory_space<vmem>>, vector<1x64xf32>
    %16 = vector.broadcast %15 : vector<1x64xf32> to vector<8x64xf32>
    %17 = arith.addf %14, %16 : vector<8x64xf32>
    %18 = arith.negf %17 : vector<8x64xf32>
    %19 = math.exp %18 : vector<8x64xf32>
    %cst_10 = arith.constant 1.000000e+00 : f32
    %20 = vector.broadcast %cst_10 : f32 to vector<8x64xf32>
    %21 = arith.addf %20, %19 : vector<8x64xf32>
    %22 = arith.divf %20, %21 : vector<8x64xf32>
    %23 = arith.mulf %17, %22 : vector<8x64xf32>
    %24 = arith.truncf %23 : vector<8x64xf32> to vector<8x64xbf16>
    %c0_11 = arith.constant 0 : index
    %c0_12 = arith.constant 0 : index
    %25 = vector.load %arg5[%c0_11, %c0_12] : memref<64x64xbf16, #tpu.memory_space<vmem>>, vector<64x64xbf16>
    %cst_13 = arith.constant dense<0.000000e+00> : vector<8x64xf32>
    %26 = tpu.matmul %24, %25, %cst_13 {dimension_numbers = #tpu.dot_dimension_numbers<[1], [0], [0], [1], [0, 0, 1, 1], [], []>} : vector<8x64xbf16>, vector<64x64xbf16>, vector<8x64xf32> -> vector<8x64xf32>
    %c0_14 = arith.constant 0 : index
    %c0_15 = arith.constant 0 : index
    %27 = vector.load %arg6[%c0_14, %c0_15] : memref<1x64xf32, #tpu.memory_space<vmem>>, vector<1x64xf32>
    %28 = vector.broadcast %27 : vector<1x64xf32> to vector<8x64xf32>
    %29 = arith.addf %26, %28 : vector<8x64xf32>
    %c0_16 = arith.constant 0 : index
    %c0_17 = arith.constant 0 : index
    %30 = vector.load %arg7[%c0_16, %c0_17] : memref<8x64xf32, #tpu.memory_space<vmem>>, vector<8x64xf32>
    tpu.vector_store %arg7[%c0_16, %c0_17], %29 {strides = array<i32>} : memref<8x64xf32, #tpu.memory_space<vmem>>, vector<8x64xf32>,
    return
  }
}

</mosaic_0001>

<llo_original>
// kernel: tpu_custom_call.1
$region0: #{tpu_custom_call.1}
  #allocation0 [shape = 'u32[]', space=smem, size = 0x4, offset = 0x4, fixed_abs, tag = 'smem constant byte address 0x4 - core index']
  #allocation1 [shape = 'u32[144,128]{1,0:T(1,128)}', space=vmem, size = 0x12000, scoped, tag = 'internal scratch']
  %s0 = inlined_call_operand.vmem [shape: s32[8,1], index: 0, kind: input, shape index: {}]
  %s1 = inlined_call_operand.hbm [shape: f32[1,16], index: 1, kind: input, shape index: {}]
  %s2 = inlined_call_operand.vmem [shape: bf16[16,64], index: 2, kind: input, shape index: {}]
  %s3 = inlined_call_operand.vmem [shape: bf16[16,64], index: 3, kind: input, shape index: {}]
  %s4 = inlined_call_operand.vmem [shape: f32[1,64], index: 4, kind: input, shape index: {}]
  %s5 = inlined_call_operand.hbm [shape: bf16[64,64], index: 5, kind: input, shape index: {}]
  %s6 = inlined_call_operand.vmem [shape: f32[1,64], index: 6, kind: input, shape index: {}]
  %s7 = inlined_call_operand.hbm [shape: f32[8,64], index: 7, kind: output, shape index: {}]
  %s8 = sld [smem:[#allocation0]]
  $region46: #{tpu_custom_call.1} parent=0
    _
  %s10 = ssub.s32 1, %s8
  %s11 = scalar_select 0, %s10, %s8
  $region1: #{tpu_custom_call.1} parent=0
    #allocation2 [shape = 'u8[512]{0}', space=vmem, size = 0x400, scoped, tag = 'input window, operand 1, single buffered']
    #allocation3 [shape = 's32[1]{0}', space=sflag, size = 0x4, scoped, tag = 'scoped memory for tpu_custom_call.1']
    #allocation4 [shape = 's32[1]{0}', space=sflag, size = 0x4, scoped, tag = 'scoped memory for tpu_custom_call.1']
    #allocation5 [shape = 'u8[16384]{0}', space=vmem, size = 0x4000, scoped, tag = 'input window, operand 5, single buffered']
    #allocation6 [shape = 's32[1]{0}', space=sflag, size = 0x4, scoped, tag = 'scoped memory for tpu_custom_call.1']
    #allocation7 [shape = 'u8[4096]{0}', space=vmem, size = 0x1000, scoped, tag = 'output window, operand 0, single buffered']
    %12 = vsyncpa [#allocation3], 0
    %13 = vsyncpa [#allocation6], 0
    %14 = vsyncpa [#allocation4], 0
    // Predicated region
    $region2: #{tpu_custom_call.1} parent=1 // pred_check
      _
    $region3: #{tpu_custom_call.1} parent=1 // pred_check_branch
      %16 = sbr.rel (0) target = $region5
    $region4: #{tpu_custom_call.1} parent=1 // pred_region
      _
    $region5: #{tpu_custom_call.1} parent=1 // pred_fallthru
      _
    // Predicated region
    $region6: #{tpu_custom_call.1} parent=1 // pred_check
      _
    $region7: #{tpu_custom_call.1} parent=1 // pred_check_branch
      %18 = sbr.rel (0) target = $region9
    $region8: #{tpu_custom_call.1} parent=1 // pred_region
      %s20 = ssub.s32 16, 16
      %21 = vsyncadd [#allocation3], %s20
      %s23 = sshll.u32 [#allocation2], 4
      %s24 = int_to_ptr.vmem [resolvable:$true] %s23
      %26 = dma.hbm_to_vmem [thread:$0]  %s1, 16, %s24, [#allocation3]
    $region9: #{tpu_custom_call.1} parent=1 // pred_fallthru
      _
    // Predicated region
    $region10: #{tpu_custom_call.1} parent=1 // pred_check
      _
    $region11: #{tpu_custom_call.1} parent=1 // pred_check_branch
      %28 = sbr.rel (0) target = $region13
    $region12: #{tpu_custom_call.1} parent=1 // pred_region
      _
    $region13: #{tpu_custom_call.1} parent=1 // pred_fallthru
      _
    // Predicated region
    $region14: #{tpu_custom_call.1} parent=1 // pred_check
      _
    $region15: #{tpu_custom_call.1} parent=1 // pred_check_branch
      %30 = sbr.rel (0) target = $region17
    $region16: #{tpu_custom_call.1} parent=1 // pred_region
      _
    $region17: #{tpu_custom_call.1} parent=1 // pred_fallthru
      _
    // Predicated region
    $region18: #{tpu_custom_call.1} parent=1 // pred_check
      _
    $region19: #{tpu_custom_call.1} parent=1 // pred_check_branch
      %32 = sbr.rel (0) target = $region21
    $region20: #{tpu_custom_call.1} parent=1 // pred_region
      _
    $region21: #{tpu_custom_call.1} parent=1 // pred_fallthru
      _
    // Predicated region
    $region22: #{tpu_custom_call.1} parent=1 // pred_check
      _
    $region23: #{tpu_custom_call.1} parent=1 // pred_check_branch
      %34 = sbr.rel (0) target = $region25
    $region24: #{tpu_custom_call.1} parent=1 // pred_region
      %s36 = ssub.s32 512, 512
      %37 = vsyncadd [#allocation6], %s36
      %s38 = sshll.u32 [#allocation5], 4
      %s39 = int_to_ptr.vmem [resolvable:$true] %s38
      %44 = dma.hbm_to_vmem [thread:$0]  %s5, 512, %s39, [#allocation6], 64, 64, 4
    $region25: #{tpu_custom_call.1} parent=1 // pred_fallthru
      _
    // Predicated region
    $region26: #{tpu_custom_call.1} parent=1 // pred_check
      _
    $region27: #{tpu_custom_call.1} parent=1 // pred_check_branch
      %46 = sbr.rel (0) target = $region29
    $region28: #{tpu_custom_call.1} parent=1 // pred_region
      _
    $region29: #{tpu_custom_call.1} parent=1 // pred_fallthru
      _
    // Predicated region
    $region30: #{tpu_custom_call.1} parent=1 // pred_check
      _
    $region31: #{tpu_custom_call.1} parent=1 // pred_check_branch
      %48 = sbr.rel (0) target = $region33
    $region32: #{tpu_custom_call.1} parent=1 // pred_region
      %49 = dma.done [#allocation3], 16
    $region33: #{tpu_custom_call.1} parent=1 // pred_fallthru
      _
    // Predicated region
    $region34: #{tpu_custom_call.1} parent=1 // pred_check
      _
    $region35: #{tpu_custom_call.1} parent=1 // pred_check_branch
      %51 = sbr.rel (0) target = $region37
    $region36: #{tpu_custom_call.1} parent=1 // pred_region
      %52 = dma.done [#allocation6], 512
    $region37: #{tpu_custom_call.1} parent=1 // pred_fallthru
      _
    %v54 = vld [vmem:[%s0] sm:$0xff]
    %v55 = vcvt.s32.f32 %v54
    %v56 = vld [vmem:[#allocation2] sm:$0x1]
    %58 = vset.pattern.permute.xlu0 0
    %59 = vperm.xlu0 %58, %v55
    %v60 = vpop.permute.xlu0 %59
    %v63 = vlaneseq
    %v64 = vshrl.u32 %v63, 7
    %v65 = vsub.s32 0, %v64
    %v66 = vrot.slane %v56, %v65
    %v68 = vmul.f32 %v60, %v66
    %v69 = vand.u32 2147483647, %v68
    %vm70 = vcmp.le.f32.partialorder %v69, 0.7853982
    %vm71 = vcmp.lt.s32.totalorder %v68, 0
    %v72 = vand.u32 %v68, 2139095040
    %v73 = vshrl.u32 %v72, 23
    %v74 = vsub.s32 %v73, 127
    %v75 = vand.u32 2147483647, %v68
    %v76 = vand.u32 %v75, 8388607
    %v77 = vor.u32 %v76, 8388608
    %v78 = vsub.s32 0, %v77
    %v79 = vadd.s32 %v74, 1
    %vm80 = vcmp.gt.s32.totalorder %v79, 0
    %v81 = vsel %vm80, %v79, 0
    %v82 = vshrl.u32 %v81, 5
    %v83 = vand.u32 %v81, 31
    %v84 = vsub.s32 32, %v83
    %v85 = vshrl.u32 683565275, %v84
    %v86 = vshll.u32 683565275, %v83
    %v87 = vshrl.u32 2475754826, %v84
    %v88 = vor.u32 %v86, %v87
    %v89 = vshll.u32 2475754826, %v83
    %v90 = vshrl.u32 2131351028, %v84
    %v91 = vor.u32 %v89, %v90
    %v92 = vshll.u32 2131351028, %v83
    %v93 = vshrl.u32 2102212464, %v84
    %v94 = vor.u32 %v92, %v93
    %v95 = vshll.u32 2102212464, %v83
    %v96 = vshrl.u32 920167782, %v84
    %v97 = vor.u32 %v95, %v96
    %v98 = vshll.u32 920167782, %v83
    %v99 = vshrl.u32 1326507024, %v84
    %v100 = vor.u32 %v98, %v99
    %vm101 = vcmp.lt.s32.totalorder %v82, 1
    %vm102 = vcmp.lt.s32.totalorder %v82, 2
    %vm103 = vcmp.lt.s32.totalorder %v82, 3
    %vm104 = vcmp.lt.s32.totalorder %v82, 4
    %v105 = vsel %vm101, %v85, %v88
    %v106 = vsel %vm104, %v94, 2102212464
    %v107 = vsel %vm103, %v91, %v106
    %v108 = vsel %vm102, %v105, %v107
    %v109 = vsel %vm101, %v88, %v91
    %v110 = vsel %vm104, %v97, 920167782
    %v111 = vsel %vm103, %v94, %v110
    %v112 = vsel %vm102, %v109, %v111
    %v113 = vsel %vm101, %v91, %v94
    %v114 = vsel %vm104, %v100, 1326507024
    %v115 = vsel %vm103, %v97, %v114
    %v116 = vsel %vm102, %v113, %v115
    %v117 = vshll.u32 %v77, 8
    %v118 = vmul.u32.u64.compose %v117, %v116
    %v119 = vextract.low.u32 %v118
    %v120 = vextract.high.u32 %v118
    %v121 = vmul.u32.u64.compose %v117, %v112
    %v122 = vextract.low.u32 %v121
    %v123 = vextract.high.u32 %v121
    %v124 = vmul.u32 %v117, %v108
    %v125 = vadd.s32 %v120, %v122
    %vm126 = vc.u32 %v120, %v122
    %v127 = vadd.s32 %v123, 1
    %v128 = vsel %vm126, %v127, %v123
    %v129 = vadd.s32 %v124, %v128
    %v130 = vadd.s32 %v129, 536870912
    %v131 = vshrl.u32 %v130, 30
    %v132 = vshll.u32 %v131, 30
    %v133 = vsub.s32 %v129, %v132
    %vm134 = vcmp.lt.s32.totalorder %v133, 0
    %v135 = vsub.s32 0, %v133
    %v136 = vsel %vm134, %v135, %v133
    %v137 = vclz %v136
    %v138 = vsub.s32 %v137, 2
    %vm139 = vcmp.gt.s32.totalorder 0, %v138
    %v140 = vsel %vm139, 0, %v138
    %v141 = vsub.s32 32, %v140
    %v142 = vshll.u32 %v133, %v140
    %v143 = vshrl.u32 %v125, %v141
    %v144 = vor.u32 %v142, %v143
    %v145 = vsub.s32 4294967266, %v140
    %v146 = vadd.s32 %v145, 127
    %v147 = vshll.u32 %v146, 23
    %v148 = vor.u32 4788187, %v147
    %v149 = vand.u32 2147483647, %v148
    %v151 = vcvt.s32.f32 %v144
    %v152 = vmul.f32 %v151, %v149
    %v153 = vxor.u32 %v152, 2147483648
    %v154 = vsel %vm71, %v153, %v152
    %v155 = vsub.s32 4, %v131
    %v156 = vsel %vm71, %v155, %v131
    %v157 = vsel %vm70, %v68, %v154
    %v158 = vsel %vm70, 0, %v156
    %v159 = vcosq.f32.pop %v157
    %v160 = vsinq.f32.pop %v157
    %vm161 = vweird.f32 %v68
    %v162 = vadd.s32 %v158, 3
    %v163 = vand.u32 %v162, 3
    %vm164 = vcmp.lt.s32.totalorder %v163, 2
    %vm165 = vcmp.eq.s32.totalorder %v163, 0
    %v166 = vxor.u32 %v160, 2147483648
    %v167 = vsel %vm165, %v159, %v166
    %vm168 = vcmp.eq.s32.totalorder %v163, 2
    %v169 = vxor.u32 %v159, 2147483648
    %v170 = vsel %vm168, %v169, %v160
    %v171 = vsel %vm164, %v167, %v170
    %v172 = vsel %vm161, nan, %v171
    %v173 = vpack.c.bf16 %v172, %v172
    %v174 = vand.u32 2147483647, %v68
    %vm175 = vcmp.le.f32.partialorder %v174, 0.7853982
    %vm176 = vcmp.lt.s32.totalorder %v68, 0
    %v177 = vand.u32 %v68, 2139095040
    %v178 = vshrl.u32 %v177, 23
    %v179 = vsub.s32 %v178, 127
    %v180 = vand.u32 2147483647, %v68
    %v181 = vand.u32 %v180, 8388607
    %v182 = vor.u32 %v181, 8388608
    %v183 = vsub.s32 0, %v182
    %v184 = vadd.s32 %v179, 1
    %vm185 = vcmp.gt.s32.totalorder %v184, 0
    %v186 = vsel %vm185, %v184, 0
    %v187 = vshrl.u32 %v186, 5
    %v188 = vand.u32 %v186, 31
    %v189 = vsub.s32 32, %v188
    %v190 = vshrl.u32 683565275, %v189
    %v191 = vshll.u32 683565275, %v188
    %v192 = vshrl.u32 2475754826, %v189
    %v193 = vor.u32 %v191, %v192
    %v194 = vshll.u32 2475754826, %v188
    %v195 = vshrl.u32 2131351028, %v189
    %v196 = vor.u32 %v194, %v195
    %v197 = vshll.u32 2131351028, %v188
    %v198 = vshrl.u32 2102212464, %v189
    %v199 = vor.u32 %v197, %v198
    %v200 = vshll.u32 2102212464, %v188
    %v201 = vshrl.u32 920167782, %v189
    %v202 = vor.u32 %v200, %v201
    %v203 = vshll.u32 920167782, %v188
    %v204 = vshrl.u32 1326507024, %v189
    %v205 = vor.u32 %v203, %v204
    %vm206 = vcmp.lt.s32.totalorder %v187, 1
    %vm207 = vcmp.lt.s32.totalorder %v187, 2
    %vm208 = vcmp.lt.s32.totalorder %v187, 3
    %vm209 = vcmp.lt.s32.totalorder %v187, 4
    %v210 = vsel %vm206, %v190, %v193
    %v211 = vsel %vm209, %v199, 2102212464
    %v212 = vsel %vm208, %v196, %v211
    %v213 = vsel %vm207, %v210, %v212
    %v214 = vsel %vm206, %v193, %v196
    %v215 = vsel %vm209, %v202, 920167782
    %v216 = vsel %vm208, %v199, %v215
    %v217 = vsel %vm207, %v214, %v216
    %v218 = vsel %vm206, %v196, %v199
    %v219 = vsel %vm209, %v205, 1326507024
    %v220 = vsel %vm208, %v202, %v219
    %v221 = vsel %vm207, %v218, %v220
    %v222 = vshll.u32 %v182, 8
    %v223 = vmul.u32.u64.compose %v222, %v221
    %v224 = vextract.low.u32 %v223
    %v225 = vextract.high.u32 %v223
    %v226 = vmul.u32.u64.compose %v222, %v217
    %v227 = vextract.low.u32 %v226
    %v228 = vextract.high.u32 %v226
    %v229 = vmul.u32 %v222, %v213
    %v230 = vadd.s32 %v225, %v227
    %vm231 = vc.u32 %v225, %v227
    %v232 = vadd.s32 %v228, 1
    %v233 = vsel %vm231, %v232, %v228
    %v234 = vadd.s32 %v229, %v233
    %v235 = vadd.s32 %v234, 536870912
    %v236 = vshrl.u32 %v235, 30
    %v237 = vshll.u32 %v236, 30
    %v238 = vsub.s32 %v234, %v237
    %vm239 = vcmp.lt.s32.totalorder %v238, 0
    %v240 = vsub.s32 0, %v238
    %v241 = vsel %vm239, %v240, %v238
    %v242 = vclz %v241
    %v243 = vsub.s32 %v242, 2
    %vm244 = vcmp.gt.s32.totalorder 0, %v243
    %v245 = vsel %vm244, 0, %v243
    %v246 = vsub.s32 32, %v245
    %v247 = vshll.u32 %v238, %v245
    %v248 = vshrl.u32 %v230, %v246
    %v249 = vor.u32 %v247, %v248
    %v250 = vsub.s32 4294967266, %v245
    %v251 = vadd.s32 %v250, 127
    %v252 = vshll.u32 %v251, 23
    %v253 = vor.u32 4788187, %v252
    %v254 = vand.u32 2147483647, %v253
    %v256 = vcvt.s32.f32 %v249
    %v257 = vmul.f32 %v256, %v254
    %v258 = vxor.u32 %v257, 2147483648
    %v259 = vsel %vm176, %v258, %v257
    %v260 = vsub.s32 4, %v236
    %v261 = vsel %vm176, %v260, %v236
    %v262 = vsel %vm175, %v68, %v259
    %v263 = vsel %vm175, 0, %v261
    %v264 = vcosq.f32.pop %v262
    %v265 = vsinq.f32.pop %v262
    %vm266 = vweird.f32 %v68
    %v267 = vand.u32 %v263, 3
    %vm268 = vcmp.lt.s32.totalorder %v267, 2
    %vm269 = vcmp.eq.s32.totalorder %v267, 0
    %v270 = vxor.u32 %v265, 2147483648
    %v271 = vsel %vm269, %v264, %v270
    %vm272 = vcmp.eq.s32.totalorder %v267, 2
    %v273 = vxor.u32 %v264, 2147483648
    %v274 = vsel %vm272, %v273, %v265
    %v275 = vsel %vm268, %v271, %v274
    %v276 = vsel %vm266, nan, %v275
    %v277 = vpack.c.bf16 %v276, %v276
    %v278 = vld [vmem:[%s2] sm:$0xf]
    %v279 = vld [vmem:[%s2 + $0x4] sm:$0xf]
    %v280 = vld [vmem:[%s3] sm:$0xf]
    %v281 = vld [vmem:[%s3 + $0x4] sm:$0xf]
    %v284 = vunpack.c.l.b16 %v280
    %v285 = vunpack.c.l.b16 %v281
    %v286 = vpack.c.b16 %v285, %v284
    %vm288 = vcmask 130048
    %v290 = vsel %vm288, %v277, 0
    %292 = vmatprep.subr.bf16.mxu0 0
    %293 = vmatpush1.bf16.msra.mxu0 %v286
    %294 = vmatprep.subr.bf16.mxu0 0
    %295 = vmatpush1.bf16.msra.mxu0 0
    %296 = vmatprep.subr.bf16.mxu0 0
    %297 = vmatpush1.bf16.msra.mxu0 0
    %298 = vmatprep.subr.bf16.mxu0 0
    %299 = vmatpush1.bf16.msra.mxu0 0
    %300 = vmatprep.subr.bf16.mxu0 0
    %301 = vmatpush1.bf16.msra.mxu0 0
    %302 = vmatprep.subr.bf16.mxu0 0
    %303 = vmatpush1.bf16.msra.mxu0 0
    %304 = vmatprep.subr.bf16.mxu0 0
    %305 = vmatpush1.bf16.msra.mxu0 0
    %306 = vmatprep.subr.bf16.mxu0 0
    %307 = vmatpush1.bf16.msra.mxu0 0
    %308 = vmatprep.subr.bf16.mxu0 0
    %309 = vmatpush1.bf16.msra.mxu0 0
    %310 = vmatprep.subr.bf16.mxu0 0
    %311 = vmatpush1.bf16.msra.mxu0 0
    %312 = vmatprep.subr.bf16.mxu0 0
    %313 = vmatpush1.bf16.msra.mxu0 0
    %314 = vmatprep.subr.bf16.mxu0 0
    %315 = vmatpush1.bf16.msra.mxu0 0
    %316 = vmatprep.subr.bf16.mxu0 0
    %317 = vmatpush1.bf16.msra.mxu0 0
    %318 = vmatprep.subr.bf16.mxu0 0
    %319 = vmatpush1.bf16.msra.mxu0 0
    %320 = vmatprep.subr.bf16.mxu0 0
    %321 = vmatpush1.bf16.msra.mxu0 0
    %322 = vmatprep.subr.bf16.mxu0 0
    %323 = vmatpush1.bf16.msra.mxu0 0
    %324 = vmatprep.mubr.bf16.mxu0 0
    %325 = vmatmul.mubr.bf16.gmra.mrb[0].mxu0 %v290
    %v326 = vpop.f32.mrb[0].mxu0
    %v327 = vadd.f32 0.0, %v326
    %v328 = vpop.f32.mrb[0].mxu0
    %v329 = vpop.f32.mrb[0].mxu0
    %v330 = vpop.f32.mrb[0].mxu0
    %331 = vdwg.mxu0
    %v334 = vunpack.c.l.b16 %v278
    %v335 = vunpack.c.l.b16 %v279
    %v336 = vpack.c.b16 %v335, %v334
    %v339 = vsel %vm288, %v173, 0
    %341 = vmatprep.subr.bf16.mxu0 0
    %342 = vmatpush1.bf16.msra.mxu0 %v336
    %343 = vmatprep.subr.bf16.mxu0 0
    %344 = vmatpush1.bf16.msra.mxu0 0
    %345 = vmatprep.subr.bf16.mxu0 0
    %346 = vmatpush1.bf16.msra.mxu0 0
    %347 = vmatprep.subr.bf16.mxu0 0
    %348 = vmatpush1.bf16.msra.mxu0 0
    %349 = vmatprep.subr.bf16.mxu0 0
    %350 = vmatpush1.bf16.msra.mxu0 0
    %351 = vmatprep.subr.bf16.mxu0 0
    %352 = vmatpush1.bf16.msra.mxu0 0
    %353 = vmatprep.subr.bf16.mxu0 0
    %354 = vmatpush1.bf16.msra.mxu0 0
    %355 = vmatprep.subr.bf16.mxu0 0
    %356 = vmatpush1.bf16.msra.mxu0 0
    %357 = vmatprep.subr.bf16.mxu0 0
    %358 = vmatpush1.bf16.msra.mxu0 0
    %359 = vmatprep.subr.bf16.mxu0 0
    %360 = vmatpush1.bf16.msra.mxu0 0
    %361 = vmatprep.subr.bf16.mxu0 0
    %362 = vmatpush1.bf16.msra.mxu0 0
    %363 = vmatprep.subr.bf16.mxu0 0
    %364 = vmatpush1.bf16.msra.mxu0 0
    %365 = vmatprep.subr.bf16.mxu0 0
    %366 = vmatpush1.bf16.msra.mxu0 0
    %367 = vmatprep.subr.bf16.mxu0 0
    %368 = vmatpush1.bf16.msra.mxu0 0
    %369 = vmatprep.subr.bf16.mxu0 0
    %370 = vmatpush1.bf16.msra.mxu0 0
    %371 = vmatprep.subr.bf16.mxu0 0
    %372 = vmatpush1.bf16.msra.mxu0 0
    %373 = vmatprep.mubr.bf16.mxu0 0
    %374 = vmatmul.mubr.bf16.gmra.mrb[0].mxu0 %v339
    %v375 = vpop.f32.mrb[0].mxu0
    %v376 = vadd.f32 %v327, %v375
    %v377 = vpop.f32.mrb[0].mxu0
    %v378 = vpop.f32.mrb[0].mxu0
    %v379 = vpop.f32.mrb[0].mxu0
    %380 = vdwg.mxu0
    %v381 = vld [vmem:[%s4] sm:$0x1]
    %v383 = vlaneseq
    %v384 = vshrl.u32 %v383, 7
    %v385 = vsub.s32 0, %v384
    %v386 = vrot.slane %v381, %v385
    %v388 = vadd.f32 %v376, %v386
    %v389 = vxor.u32 %v388, 2147483648
    %v390 = vmul.f32 %v389, 1.442695
    %v391 = vpow.pop %v390
    %v392 = vadd.f32 %v391, 1.0
    %v393 = vrcp.pop %v392
    %v394 = vmul.f32 1.0, %v393
    %v395 = vmul.f32 %v388, %v394
    %v396 = vpack.c.bf16 %v395, %v395
    %v397 = vld [vmem:[#allocation5] sm:$0xf]
    %v398 = vld [vmem:[#allocation5 + $0x4] sm:$0xf]
    %v399 = vld [vmem:[#allocation5 + $0x8] sm:$0xf]
    %v400 = vld [vmem:[#allocation5 + $0xc] sm:$0xf]
    %v401 = vld [vmem:[#allocation5 + $0x10] sm:$0xf]
    %v402 = vld [vmem:[#allocation5 + $0x14] sm:$0xf]
    %v403 = vld [vmem:[#allocation5 + $0x18] sm:$0xf]
    %v404 = vld [vmem:[#allocation5 + $0x1c] sm:$0xf]
    %v405 = vld [vmem:[%s6] sm:$0x1]
    %v407 = vlaneseq
    %v408 = vshrl.u32 %v407, 7
    %v409 = vsub.s32 0, %v408
    %v410 = vrot.slane %v405, %v409
    %v420 = vunpack.c.l.b16 %v397
    %v421 = vunpack.c.l.b16 %v398
    %v422 = vunpack.c.l.b16 %v399
    %v423 = vunpack.c.l.b16 %v400
    %v424 = vunpack.c.l.b16 %v401
    %v425 = vunpack.c.l.b16 %v402
    %v426 = vunpack.c.l.b16 %v403
    %v427 = vunpack.c.l.b16 %v404
    %v428 = vpack.c.b16 %v421, %v420
    %v429 = vpack.c.b16 %v423, %v422
    %v430 = vpack.c.b16 %v425, %v424
    %v431 = vpack.c.b16 %v427, %v426
    %vm436 = vcmask 523264
    %v438 = vsel %vm436, %v396, 0
    %440 = vmatprep.subr.bf16.mxu0 0
    %441 = vmatpush1.bf16.msra.mxu0 %v428
    %442 = vmatprep.subr.bf16.mxu0 0
    %443 = vmatpush1.bf16.msra.mxu0 %v429
    %444 = vmatprep.subr.bf16.mxu0 0
    %445 = vmatpush1.bf16.msra.mxu0 %v430
    %446 = vmatprep.subr.bf16.mxu0 0
    %447 = vmatpush1.bf16.msra.mxu0 %v431
    %448 = vmatprep.subr.bf16.mxu0 0
    %449 = vmatpush1.bf16.msra.mxu0 0
    %450 = vmatprep.subr.bf16.mxu0 0
    %451 = vmatpush1.bf16.msra.mxu0 0
    %452 = vmatprep.subr.bf16.mxu0 0
    %453 = vmatpush1.bf16.msra.mxu0 0
    %454 = vmatprep.subr.bf16.mxu0 0
    %455 = vmatpush1.bf16.msra.mxu0 0
    %456 = vmatprep.subr.bf16.mxu0 0
    %457 = vmatpush1.bf16.msra.mxu0 0
    %458 = vmatprep.subr.bf16.mxu0 0
    %459 = vmatpush1.bf16.msra.mxu0 0
    %460 = vmatprep.subr.bf16.mxu0 0
    %461 = vmatpush1.bf16.msra.mxu0 0
    %462 = vmatprep.subr.bf16.mxu0 0
    %463 = vmatpush1.bf16.msra.mxu0 0
    %464 = vmatprep.subr.bf16.mxu0 0
    %465 = vmatpush1.bf16.msra.mxu0 0
    %466 = vmatprep.subr.bf16.mxu0 0
    %467 = vmatpush1.bf16.msra.mxu0 0
    %468 = vmatprep.subr.bf16.mxu0 0
    %469 = vmatpush1.bf16.msra.mxu0 0
    %470 = vmatprep.subr.bf16.mxu0 0
    %471 = vmatpush1.bf16.msra.mxu0 0
    %472 = vmatprep.mubr.bf16.mxu0 0
    %473 = vmatmul.mubr.bf16.gmra.mrb[0].mxu0 %v438
    %v474 = vpop.f32.mrb[0].mxu0
    %v475 = vadd.f32 %v410, %v474
    %v476 = vpop.f32.mrb[0].mxu0
    %v477 = vpop.f32.mrb[0].mxu0
    %v478 = vpop.f32.mrb[0].mxu0
    %479 = vdwg.mxu0
    %480 = vst.msk [vmem:[#allocation7] sm:$0xff] %vm436, %v475
    // Predicated region
    $region38: #{tpu_custom_call.1} parent=1 // pred_check
      _
    $region39: #{tpu_custom_call.1} parent=1 // pred_check_branch
      %482 = sbr.rel (0) target = $region41
    $region40: #{tpu_custom_call.1} parent=1 // pred_region
      %s484 = ssub.s32 128, 128
      %485 = vsyncadd [#allocation4], %s484
      %s487 = sshll.u32 [#allocation7], 4
      %s488 = int_to_ptr.vmem [resolvable:$true] %s487
      %490 = dma.vmem_to_hbm [thread:$0]  %s488, 128, %s7, [#allocation4]
    $region41: #{tpu_custom_call.1} parent=1 // pred_fallthru
      _
    // Predicated region
    $region42: #{tpu_custom_call.1} parent=1 // pred_check
      _
    $region43: #{tpu_custom_call.1} parent=1 // pred_check_branch
      %492 = sbr.rel (0) target = $region45
    $region44: #{tpu_custom_call.1} parent=1 // pred_region
      %493 = dma.done [#allocation4], 128
    $region45: #{tpu_custom_call.1} parent=1 // pred_fallthru
      _
    %494 = vsyncpa [#allocation3], 1
    %495 = vsyncpa [#allocation6], 1
    %496 = vsyncpa [#allocation4], 1

</llo_original>
